<compile_context>
chip_gen: v7x
topology: tpu7x:2x2x1
jax: 0.10.0
libtpu: 0.0.40
codegen_flags: <defaults>
</compile_context>

<pallas_src>
import jax
import jax.numpy as jnp
from jax.experimental import pallas as pl
from jax.experimental.pallas import tpu as pltpu


def _round_up(x, m):
    return (x + m - 1) // m * m


def _largest_tile(total, candidates):
    """Largest candidate that divides `total` (candidates sorted descending)."""
    for c in candidates:
        if c <= total and total % c == 0:
            return c
    return total


def _tpu_defaults():
    """(tile_nodes, vmem_limit_bytes) tuned per TPU generation (guarded probes)."""
    vmem_cap = 64 * 1024 * 1024                     # conservative fallback (v7x: 64 MiB/TC)
    try:
        vmem_cap = int(pltpu.get_tpu_info().vmem_capacity_bytes)
    except Exception:
        pass
    tile_nodes = 256                                # v6e/v7x MXU is 2x256x256
    try:
        if "v5" in jax.devices()[0].device_kind.lower():
            tile_nodes = 128                        # v5e MXU is 4x128x128
    except Exception:
        pass
    # ~75% of capacity: 96 MiB on v5e/v6e, 48 MiB on v7x.
    return tile_nodes, int(vmem_cap * 3 // 4)


# ---------------------------------------------------------------------------
# Kernel 1: neighbor mean aggregation (row-tiled + K-tiled adjacency matmul)
# ---------------------------------------------------------------------------
def _agg_kernel(adj_ref, feat_ref, own_ref, inv_deg_ref, keep_ref, out_ref, acc_ref):
    """adj_ref : (TM, TK) bf16  adjacency rows of this tile's dst nodes, one src chunk
    feat_ref   : (TK, F)  bf16  source-node features of this chunk, F = M*IN
    own_ref    : (TM, F)  bf16  this tile's own features (zero-in-degree fallback)
    inv_deg_ref: (TM, 1)  f32   exact 1/in-degree (0 for isolated / padded nodes)
    keep_ref   : (TM, 1)  f32   1.0 where in-degree == 0 else 0.0
    out_ref    : (TM, F)  bf16  mean-aggregated features (lane-dense slab)
    acc_ref    : (TM, F)  f32   VMEM accumulator, resident across the K grid axis"""
    k = pl.program_id(1)

    @pl.when(k == 0)
    def _():
        acc_ref[...] = jnp.zeros_like(acc_ref)

    acc_ref[...] += jnp.dot(adj_ref[...], feat_ref[...],
                            preferred_element_type=jnp.float32)

    @pl.when(k == pl.num_programs(1) - 1)
    def _():
        # Isolated (and padded) rows have acc == 0 and inv_deg == 0, so the DGL
        # "keep own feature when no messages arrive" rule is a pure FMA, no select.
        h = acc_ref[...] * inv_deg_ref[...] + keep_ref[...] * own_ref[...].astype(jnp.float32)
        out_ref[...] = h.astype(out_ref.dtype)


# ---------------------------------------------------------------------------
# Kernel 2: per-node bmm + ReLU, batched over TB nodes per grid step
# ---------------------------------------------------------------------------
def _bmm_relu_kernel(h_ref, we_ref, out_ref):
    """h_ref: (TB, M, IN) bf16, we_ref: (TB, IN, OUT) bf16, out_ref: (TB, M, OUT) f32."""
    y = jnp.einsum("bmk,bkp->bmp", h_ref[...], we_ref[...],
                   preferred_element_type=jnp.float32)
    out_ref[...] = jnp.maximum(y, 0.0)                        # ReLU activation


def gcn_forward(adjacency, feature, edge_we, *, tile_nodes=None, vmem_limit_bytes=None):
    """feature: [N, M, IN], adjacency: [N, N], edge_we: [N, IN, OUT] -> [N, M, OUT]."""
    N, M, IN = feature.shape
    OUT = edge_we.shape[-1]
    F = M * IN

    auto_tm, auto_vmem = _tpu_defaults()
    if tile_nodes is None:
        tile_nodes = auto_tm
    if vmem_limit_bytes is None:
        vmem_limit_bytes = auto_vmem

    # Destination-row tile (MXU-shaped) and padded node count.  Np is a multiple of
    # max(TM, 128) so the adjacency lane / MXU contraction dims stay full-128-lane
    # aligned (no masked loads, no ragged K remainders).
    TM = max(128, min(tile_nodes, _round_up(N, 128)))
    Np = _round_up(N, max(TM, 128))
    # Source-node (K) chunk: largest 128-multiple <= 1024 dividing Np.  VMEM use is
    # flat in N while blocks stay wide enough for the HBM roofline.
    TK = _largest_tile(Np, (1024, 512, 256, 128))
    # Apply-stage node tile: per-node footprint is only a few KB, so go big.
    TB = _largest_tile(Np, (512, 256, 128))

    pad = Np - N
    # bf16 operands for the MXU (adjacency 0/1 is exact in bf16); accumulation f32.
    adj_b = jnp.pad(adjacency.astype(jnp.float32), ((0, pad), (0, pad))).astype(jnp.bfloat16)
    feat_b = jnp.pad(feature.astype(jnp.float32).reshape(N, F),
                     ((0, pad), (0, 0))).astype(jnp.bfloat16)
    we_b = jnp.pad(edge_we.astype(jnp.float32),
                   ((0, pad), (0, 0), (0, 0))).astype(jnp.bfloat16)

    # Exact inverse in-degree + zero-in-degree mask precomputed once in XLA
    # (replaces the in-kernel approx reciprocal).  Padded rows: deg 0 -> inv 0,
    # keep 1, own features 0 -> harmless zeros that get sliced off.
    deg = jnp.pad(jnp.sum(adjacency.astype(jnp.float32), axis=1), (0, pad))
    inv_deg = jnp.where(deg > 0, 1.0 / jnp.maximum(deg, 1.0), 0.0).astype(jnp.float32)[:, None]
    keep = (deg == 0).astype(jnp.float32)[:, None]

    cparams1 = pltpu.CompilerParams(
        dimension_semantics=("parallel", "arbitrary"),   # rows across cores, K serial
        vmem_limit_bytes=vmem_limit_bytes,
    )
    cparams2 = pltpu.CompilerParams(
        dimension_semantics=("parallel",),
        vmem_limit_bytes=vmem_limit_bytes,
    )

    # ---- Stage 1: neighbor mean aggregation (f32 accumulator over K chunks) ----
    h_agg2d = pl.pallas_call(
        _agg_kernel,
        out_shape=jax.ShapeDtypeStruct((Np, F), jnp.bfloat16),
        grid=(Np // TM, Np // TK),
        in_specs=[
            pl.BlockSpec((TM, TK), lambda i, k: (i, k)),   # adjacency tile
            pl.BlockSpec((TK, F), lambda i, k: (k, 0)),    # source-feature chunk
            pl.BlockSpec((TM, F), lambda i, k: (i, 0)),    # own features (dst tile)
            pl.BlockSpec((TM, 1), lambda i, k: (i, 0)),    # exact 1/in-degree
            pl.BlockSpec((TM, 1), lambda i, k: (i, 0)),    # zero-in-degree mask
        ],
        out_specs=pl.BlockSpec((TM, F), lambda i, k: (i, 0)),
        scratch_shapes=[pltpu.VMEM((TM, F), jnp.float32)],
        compiler_params=cparams1,
        cost_estimate=pl.CostEstimate(
            flops=2 * Np * Np * F,
            transcendentals=0,
            bytes_accessed=2 * Np * Np + 2 * Np * F * (Np // TM) + 4 * Np * F + 8 * Np,
        ),
    )(adj_b, feat_b, feat_b, inv_deg, keep)

    # Node-major contiguous bf16 intermediate: the (Np, F) -> (Np, M, IN) relayout is
    # a free metadata reshape in XLA/HBM (no data movement).
    h_agg = h_agg2d.reshape(Np, M, IN)

    # ---- Stage 2: per-node bmm + ReLU ---------------------------------------
    out_p = pl.pallas_call(
        _bmm_relu_kernel,
        out_shape=jax.ShapeDtypeStruct((Np, M, OUT), jnp.float32),
        grid=(Np // TB,),
        in_specs=[
            pl.BlockSpec((TB, M, IN), lambda i: (i, 0, 0)),
            pl.BlockSpec((TB, IN, OUT), lambda i: (i, 0, 0)),
        ],
        out_specs=pl.BlockSpec((TB, M, OUT), lambda i: (i, 0, 0)),
        compiler_params=cparams2,
        cost_estimate=pl.CostEstimate(
            flops=2 * Np * M * IN * OUT,
            transcendentals=0,
            bytes_accessed=2 * Np * (M * IN + IN * OUT) + 4 * Np * M * OUT,
        ),
    )(h_agg, we_b)

    return out_p[:N]


def _reference(adjacency, feature, edge_we):
    """Pure-JAX f32 reference of the DGL GCN forward."""
    deg = jnp.sum(adjacency, axis=1, keepdims=True)              # (N, 1)
    agg = jnp.einsum("vu,umk->vmk", adjacency, feature)
    mean = agg / jnp.maximum(deg, 1.0)[..., None]
    h = jnp.where((deg > 0.0)[..., None], mean, feature)
    return jnp.maximum(jnp.einsum("vmk,vkp->vmp", h, edge_we), 0.0)


if __name__ == "__main__":
    key = jax.random.PRNGKey(0)
    N, M, IN, OUT = 16, 8, 32, 32
    NUM_RELS = 4  # stands in for len(type_index_dic) (file not readable)

    k_adj, k_feat, k_we, k_ww = jax.random.split(key, 4)

    # Random directed graph; add a ring so most nodes have in-edges, then clear one
    # row so the zero-in-degree "keep own feature" path is exercised too.
    adjacency = jax.random.bernoulli(k_adj, p=0.3, shape=(N, N)).astype(jnp.float32)
    ring = jnp.zeros((N, N), jnp.float32).at[jnp.arange(N), (jnp.arange(N) + 1) % N].set(1.0)
    adjacency = jnp.maximum(adjacency, ring)
    adjacency = adjacency.at[3, :].set(0.0)          # node 3: no incoming edges

    feature = jax.random.normal(k_feat, (N, M, IN), dtype=jnp.float32)
    edge_we = jax.random.normal(k_we, (N, IN, OUT), dtype=jnp.float32) * 0.1

    # Deterministic init of the (unused-in-forward) NodeApplyModule parameter,
    # matching nn.Parameter(torch.Tensor(num_ref, out_feats, in_feats)).
    weight_whole = jax.random.normal(k_ww, (NUM_RELS, OUT, IN), dtype=jnp.float32) * 0.1
    del weight_whole  # not consumed by the reference forward pass either

    out = gcn_forward(adjacency, feature, edge_we)
    out = jax.block_until_ready(out)
    assert out.shape == (N, M, OUT)

    # The kernels run the matmuls in bf16 (with f32 accumulation), so compare both
    # against a bf16-quantised-input reference (tight) and the pure-f32 reference
    # (loose, covers the intentional quantisation error).
    f_q = feature.astype(jnp.bfloat16).astype(jnp.float32)
    w_q = edge_we.astype(jnp.bfloat16).astype(jnp.float32)
    ref_q = _reference(adjacency, f_q, w_q)
    ref = _reference(adjacency, feature, edge_we)
    assert jnp.allclose(out, ref_q, atol=2e-2, rtol=2e-2), "mismatch vs bf16-input reference"
    assert jnp.allclose(out, ref, atol=5e-2, rtol=5e-2), "mismatch vs f32 reference"

    print("KERNEL_OK")
</pallas_src>

<mosaic_0001>
module attributes {stable_mosaic.version = 11 : i64} {
  func.func @_agg_kernel(%arg0: i32, %arg1: i32, %arg2: memref<128x128xbf16, #tpu.memory_space<vmem>>, %arg3: memref<128x256xbf16, #tpu.memory_space<vmem>>, %arg4: memref<128x256xbf16, #tpu.memory_space<vmem>>, %arg5: memref<128x1xf32, #tpu.memory_space<vmem>>, %arg6: memref<128x1xf32, #tpu.memory_space<vmem>>, %arg7: memref<128x256xbf16, #tpu.memory_space<vmem>>, %arg8: memref<128x256xf32, #tpu.memory_space<vmem>>) attributes {dimension_semantics = [#tpu.dimension_semantics<parallel>, #tpu.dimension_semantics<arbitrary>], iteration_bounds = array<i64: 1, 1>, scalar_prefetch = 0 : i64, scratch_operands = 1 : i64, tpu.core_type = #tpu.core_type<tc>, window_params = [{transform_indices = @transform_0, window_bounds = array<i64: 128, 128>}, {transform_indices = @transform_1, window_bounds = array<i64: 128, 256>}, {transform_indices = @transform_2, window_bounds = array<i64: 128, 256>}, {transform_indices = @transform_3, window_bounds = array<i64: 128, 1>}, {transform_indices = @transform_4, window_bounds = array<i64: 128, 1>}, {transform_indices = @transform_5, window_bounds = array<i64: 128, 256>}]} {
    %c0_i32 = arith.constant 0 : i32
    %0 = arith.cmpi eq, %arg1, %c0_i32 : i32
    %1 = arith.extui %0 : i1 to i32
    %c0_i32_0 = arith.constant 0 : i32
    %2 = arith.cmpi ne, %1, %c0_i32_0 : i32
    scf.if %2 {
      %cst_10 = arith.constant 0.000000e+00 : f32
      %12 = vector.broadcast %cst_10 : f32 to vector<128x256xf32>
      %c0_11 = arith.constant 0 : index
      %c0_12 = arith.constant 0 : index
      %13 = vector.load %arg8[%c0_11, %c0_12] : memref<128x256xf32, #tpu.memory_space<vmem>>, vector<128x256xf32>
      tpu.vector_store %arg8[%c0_11, %c0_12], %12 {strides = array<i32>} : memref<128x256xf32, #tpu.memory_space<vmem>>, vector<128x256xf32>,
    } else {
    }
    %c0 = arith.constant 0 : index
    %c0_1 = arith.constant 0 : index
    %3 = vector.load %arg8[%c0, %c0_1] : memref<128x256xf32, #tpu.memory_space<vmem>>, vector<128x256xf32>
    %c0_2 = arith.constant 0 : index
    %c0_3 = arith.constant 0 : index
    %4 = vector.load %arg2[%c0_2, %c0_3] : memref<128x128xbf16, #tpu.memory_space<vmem>>, vector<128x128xbf16>
    %c0_4 = arith.constant 0 : index
    %c0_5 = arith.constant 0 : index
    %5 = vector.load %arg3[%c0_4, %c0_5] : memref<128x256xbf16, #tpu.memory_space<vmem>>, vector<128x256xbf16>
    %cst = arith.constant dense<0.000000e+00> : vector<128x256xf32>
    %6 = tpu.matmul %4, %5, %cst {dimension_numbers = #tpu.dot_dimension_numbers<[1], [0], [0], [1], [0, 0, 1, 1], [], []>} : vector<128x128xbf16>, vector<128x256xbf16>, vector<128x256xf32> -> vector<128x256xf32>
    %7 = arith.addf %3, %6 : vector<128x256xf32>
    %c0_6 = arith.constant 0 : index
    %c0_7 = arith.constant 0 : index
    %8 = vector.load %arg8[%c0_6, %c0_7] : memref<128x256xf32, #tpu.memory_space<vmem>>, vector<128x256xf32>
    tpu.vector_store %arg8[%c0_6, %c0_7], %7 {strides = array<i32>} : memref<128x256xf32, #tpu.memory_space<vmem>>, vector<128x256xf32>,
    %c0_i32_8 = arith.constant 0 : i32
    %9 = arith.cmpi eq, %arg1, %c0_i32_8 : i32
    %10 = arith.extui %9 : i1 to i32
    %c0_i32_9 = arith.constant 0 : i32
    %11 = arith.cmpi ne, %10, %c0_i32_9 : i32
    scf.if %11 {
      %c0_10 = arith.constant 0 : index
      %c0_11 = arith.constant 0 : index
      %12 = vector.load %arg8[%c0_10, %c0_11] : memref<128x256xf32, #tpu.memory_space<vmem>>, vector<128x256xf32>
      %c0_12 = arith.constant 0 : index
      %c0_13 = arith.constant 0 : index
      %13 = vector.load %arg5[%c0_12, %c0_13] : memref<128x1xf32, #tpu.memory_space<vmem>>, vector<128x1xf32>
      %14 = vector.broadcast %13 : vector<128x1xf32> to vector<128x256xf32>
      %15 = arith.mulf %12, %14 : vector<128x256xf32>
      %c0_14 = arith.constant 0 : index
      %c0_15 = arith.constant 0 : index
      %16 = vector.load %arg6[%c0_14, %c0_15] : memref<128x1xf32, #tpu.memory_space<vmem>>, vector<128x1xf32>
      %c0_16 = arith.constant 0 : index
      %c0_17 = arith.constant 0 : index
      %17 = vector.load %arg4[%c0_16, %c0_17] : memref<128x256xbf16, #tpu.memory_space<vmem>>, vector<128x256xbf16>
      %18 = arith.extf %17 : vector<128x256xbf16> to vector<128x256xf32>
      %19 = vector.broadcast %16 : vector<128x1xf32> to vector<128x256xf32>
      %20 = arith.mulf %19, %18 : vector<128x256xf32>
      %21 = arith.addf %15, %20 : vector<128x256xf32>
      %22 = arith.truncf %21 : vector<128x256xf32> to vector<128x256xbf16>
      %c0_18 = arith.constant 0 : index
      %c0_19 = arith.constant 0 : index
      %23 = vector.load %arg7[%c0_18, %c0_19] : memref<128x256xbf16, #tpu.memory_space<vmem>>, vector<128x256xbf16>
      tpu.vector_store %arg7[%c0_18, %c0_19], %22 {strides = array<i32>} : memref<128x256xbf16, #tpu.memory_space<vmem>>, vector<128x256xbf16>,
    } else {
    }
    return
  }
  func.func @transform_0(%arg0: i32, %arg1: i32) -> (i32, i32) {
    %c0_i32 = arith.constant 0 : i32
    return %arg0, %arg1 : i32, i32
  }
  func.func @transform_1(%arg0: i32, %arg1: i32) -> (i32, i32) {
    %c0_i32 = arith.constant 0 : i32
    %c0_i32_0 = arith.constant 0 : i32
    return %arg1, %c0_i32 : i32, i32
  }
  func.func @transform_2(%arg0: i32, %arg1: i32) -> (i32, i32) {
    %c0_i32 = arith.constant 0 : i32
    %c0_i32_0 = arith.constant 0 : i32
    return %arg0, %c0_i32 : i32, i32
  }
  func.func @transform_3(%arg0: i32, %arg1: i32) -> (i32, i32) {
    %c0_i32 = arith.constant 0 : i32
    %c0_i32_0 = arith.constant 0 : i32
    return %arg0, %c0_i32 : i32, i32
  }
  func.func @transform_4(%arg0: i32, %arg1: i32) -> (i32, i32) {
    %c0_i32 = arith.constant 0 : i32
    %c0_i32_0 = arith.constant 0 : i32
    return %arg0, %c0_i32 : i32, i32
  }
  func.func @transform_5(%arg0: i32, %arg1: i32) -> (i32, i32) {
    %c0_i32 = arith.constant 0 : i32
    %c0_i32_0 = arith.constant 0 : i32
    return %arg0, %c0_i32 : i32, i32
  }
}

</mosaic_0001>

<llo_original>
// kernel: tpu_custom_call.1
$region0: #{tpu_custom_call.1}
  #allocation0 [shape = 'u32[]', space=smem, size = 0x4, offset = 0x4, fixed_abs, tag = 'smem constant byte address 0x4 - core index']
  #allocation1 [shape = 'u32[144,128]{1,0:T(1,128)}', space=vmem, size = 0x12000, scoped, tag = 'internal scratch']
  #allocation2 [shape = 'f32[128,256]{1,0:T(8,128)}', space=vmem, size = 0x20000, scoped, tag = 'scratch operand']
  %s0 = inlined_call_operand.hbm [shape: bf16[128,128], index: 0, kind: input, shape index: {}]
  %s1 = inlined_call_operand.vmem [shape: bf16[128,256], index: 1, kind: input, shape index: {}]
  %s2 = inlined_call_operand.vmem [shape: bf16[128,256], index: 2, kind: input, shape index: {}]
  %s3 = inlined_call_operand.vmem [shape: f32[128,1], index: 3, kind: input, shape index: {}]
  %s4 = inlined_call_operand.vmem [shape: f32[128,1], index: 4, kind: input, shape index: {}]
  %s5 = inlined_call_operand.hbm [shape: bf16[128,256], index: 5, kind: output, shape index: {}]
  %s6 = sld [smem:[#allocation0]]
  $region42: #{tpu_custom_call.1} parent=0
    _
  %s8 = ssub.s32 1, %s6
  %s9 = scalar_select 0, %s8, %s6
  $region1: #{tpu_custom_call.1} parent=0
    #allocation3 [shape = 'u8[32768]{0}', space=vmem, size = 0x8000, scoped, tag = 'input window, operand 0, single buffered']
    #allocation4 [shape = 's32[1]{0}', space=sflag, size = 0x4, scoped, tag = 'scoped memory for tpu_custom_call.1']
    #allocation5 [shape = 's32[1]{0}', space=sflag, size = 0x4, scoped, tag = 'scoped memory for tpu_custom_call.1']
    #allocation6 [shape = 'u8[65536]{0}', space=vmem, size = 0x10000, scoped, tag = 'output window, operand 0, single buffered']
    %10 = vsyncpa [#allocation4], 0
    %11 = vsyncpa [#allocation5], 0
    // Predicated region
    $region2: #{tpu_custom_call.1} parent=1 // pred_check
      _
    $region3: #{tpu_custom_call.1} parent=1 // pred_check_branch
      %13 = sbr.rel (0) target = $region5
    $region4: #{tpu_custom_call.1} parent=1 // pred_region
      %s15 = ssub.s32 1024, 1024
      %16 = vsyncadd [#allocation4], %s15
      %s17 = sshll.u32 [#allocation3], 4
      %s18 = int_to_ptr.vmem [resolvable:$true] %s17
      %23 = dma.hbm_to_vmem [thread:$0]  %s0, 1024, %s18, [#allocation4], 64, 64, 4
    $region5: #{tpu_custom_call.1} parent=1 // pred_fallthru
      _
    // Predicated region
    $region6: #{tpu_custom_call.1} parent=1 // pred_check
      _
    $region7: #{tpu_custom_call.1} parent=1 // pred_check_branch
      %25 = sbr.rel (0) target = $region9
    $region8: #{tpu_custom_call.1} parent=1 // pred_region
      _
    $region9: #{tpu_custom_call.1} parent=1 // pred_fallthru
      _
    // Predicated region
    $region10: #{tpu_custom_call.1} parent=1 // pred_check
      _
    $region11: #{tpu_custom_call.1} parent=1 // pred_check_branch
      %27 = sbr.rel (0) target = $region13
    $region12: #{tpu_custom_call.1} parent=1 // pred_region
      _
    $region13: #{tpu_custom_call.1} parent=1 // pred_fallthru
      _
    // Predicated region
    $region14: #{tpu_custom_call.1} parent=1 // pred_check
      _
    $region15: #{tpu_custom_call.1} parent=1 // pred_check_branch
      %29 = sbr.rel (0) target = $region17
    $region16: #{tpu_custom_call.1} parent=1 // pred_region
      _
    $region17: #{tpu_custom_call.1} parent=1 // pred_fallthru
      _
    // Predicated region
    $region18: #{tpu_custom_call.1} parent=1 // pred_check
      _
    $region19: #{tpu_custom_call.1} parent=1 // pred_check_branch
      %31 = sbr.rel (0) target = $region21
    $region20: #{tpu_custom_call.1} parent=1 // pred_region
      _
    $region21: #{tpu_custom_call.1} parent=1 // pred_fallthru
      _
    // Predicated region
    $region22: #{tpu_custom_call.1} parent=1 // pred_check
      _
    $region23: #{tpu_custom_call.1} parent=1 // pred_check_branch
      %33 = sbr.rel (0) target = $region25
    $region24: #{tpu_custom_call.1} parent=1 // pred_region
      %34 = dma.done [#allocation4], 1024
    $region25: #{tpu_custom_call.1} parent=1 // pred_fallthru
      _
    %p36 = scmp.eq.s32.totalorder 0, 0
    // Predicated region
    $region26: #{tpu_custom_call.1} parent=1 // pred_check
      %p37 = pneg %p36
    $region27: #{tpu_custom_call.1} parent=1 // pred_check_branch
      %39 = sbr.rel (%p37) target = $region29
    $region28: #{tpu_custom_call.1} parent=1 // pred_region
      %40 = vst [vmem:[#allocation2] sm:$0xff] 0.0
      %41 = vst [vmem:[#allocation2 + $0x8] sm:$0xff] 0.0
      %42 = vst [vmem:[#allocation2 + $0x10] sm:$0xff] 0.0
      %43 = vst [vmem:[#allocation2 + $0x18] sm:$0xff] 0.0
      %44 = vst [vmem:[#allocation2 + $0x20] sm:$0xff] 0.0
      %45 = vst [vmem:[#allocation2 + $0x28] sm:$0xff] 0.0
      %46 = vst [vmem:[#allocation2 + $0x30] sm:$0xff] 0.0
      %47 = vst [vmem:[#allocation2 + $0x38] sm:$0xff] 0.0
      %48 = vst [vmem:[#allocation2 + $0x40] sm:$0xff] 0.0
      %49 = vst [vmem:[#allocation2 + $0x48] sm:$0xff] 0.0
      %50 = vst [vmem:[#allocation2 + $0x50] sm:$0xff] 0.0
      %51 = vst [vmem:[#allocation2 + $0x58] sm:$0xff] 0.0
      %52 = vst [vmem:[#allocation2 + $0x60] sm:$0xff] 0.0
      %53 = vst [vmem:[#allocation2 + $0x68] sm:$0xff] 0.0
      %54 = vst [vmem:[#allocation2 + $0x70] sm:$0xff] 0.0
      %55 = vst [vmem:[#allocation2 + $0x78] sm:$0xff] 0.0
      %56 = vst [vmem:[#allocation2 + $0x80] sm:$0xff] 0.0
      %57 = vst [vmem:[#allocation2 + $0x88] sm:$0xff] 0.0
      %58 = vst [vmem:[#allocation2 + $0x90] sm:$0xff] 0.0
      %59 = vst [vmem:[#allocation2 + $0x98] sm:$0xff] 0.0
      %60 = vst [vmem:[#allocation2 + $0xa0] sm:$0xff] 0.0
      %61 = vst [vmem:[#allocation2 + $0xa8] sm:$0xff] 0.0
      %62 = vst [vmem:[#allocation2 + $0xb0] sm:$0xff] 0.0
      %63 = vst [vmem:[#allocation2 + $0xb8] sm:$0xff] 0.0
      %64 = vst [vmem:[#allocation2 + $0xc0] sm:$0xff] 0.0
      %65 = vst [vmem:[#allocation2 + $0xc8] sm:$0xff] 0.0
      %66 = vst [vmem:[#allocation2 + $0xd0] sm:$0xff] 0.0
      %67 = vst [vmem:[#allocation2 + $0xd8] sm:$0xff] 0.0
      %68 = vst [vmem:[#allocation2 + $0xe0] sm:$0xff] 0.0
      %69 = vst [vmem:[#allocation2 + $0xe8] sm:$0xff] 0.0
      %70 = vst [vmem:[#allocation2 + $0xf0] sm:$0xff] 0.0
      %71 = vst [vmem:[#allocation2 + $0xf8] sm:$0xff] 0.0
    $region29: #{tpu_custom_call.1} parent=1 // pred_fallthru
      _
    %v72 = vld [vmem:[#allocation2] sm:$0xff]
    %v73 = vld [vmem:[#allocation2 + $0x8] sm:$0xff]
    %v74 = vld [vmem:[#allocation2 + $0x10] sm:$0xff]
    %v75 = vld [vmem:[#allocation2 + $0x18] sm:$0xff]
    %v76 = vld [vmem:[#allocation2 + $0x20] sm:$0xff]
    %v77 = vld [vmem:[#allocation2 + $0x28] sm:$0xff]
    %v78 = vld [vmem:[#allocation2 + $0x30] sm:$0xff]
    %v79 = vld [vmem:[#allocation2 + $0x38] sm:$0xff]
    %v80 = vld [vmem:[#allocation2 + $0x40] sm:$0xff]
    %v81 = vld [vmem:[#allocation2 + $0x48] sm:$0xff]
    %v82 = vld [vmem:[#allocation2 + $0x50] sm:$0xff]
    %v83 = vld [vmem:[#allocation2 + $0x58] sm:$0xff]
    %v84 = vld [vmem:[#allocation2 + $0x60] sm:$0xff]
    %v85 = vld [vmem:[#allocation2 + $0x68] sm:$0xff]
    %v86 = vld [vmem:[#allocation2 + $0x70] sm:$0xff]
    %v87 = vld [vmem:[#allocation2 + $0x78] sm:$0xff]
    %v88 = vld [vmem:[#allocation2 + $0x80] sm:$0xff]
    %v89 = vld [vmem:[#allocation2 + $0x88] sm:$0xff]
    %v90 = vld [vmem:[#allocation2 + $0x90] sm:$0xff]
    %v91 = vld [vmem:[#allocation2 + $0x98] sm:$0xff]
    %v92 = vld [vmem:[#allocation2 + $0xa0] sm:$0xff]
    %v93 = vld [vmem:[#allocation2 + $0xa8] sm:$0xff]
    %v94 = vld [vmem:[#allocation2 + $0xb0] sm:$0xff]
    %v95 = vld [vmem:[#allocation2 + $0xb8] sm:$0xff]
    %v96 = vld [vmem:[#allocation2 + $0xc0] sm:$0xff]
    %v97 = vld [vmem:[#allocation2 + $0xc8] sm:$0xff]
    %v98 = vld [vmem:[#allocation2 + $0xd0] sm:$0xff]
    %v99 = vld [vmem:[#allocation2 + $0xd8] sm:$0xff]
    %v100 = vld [vmem:[#allocation2 + $0xe0] sm:$0xff]
    %v101 = vld [vmem:[#allocation2 + $0xe8] sm:$0xff]
    %v102 = vld [vmem:[#allocation2 + $0xf0] sm:$0xff]
    %v103 = vld [vmem:[#allocation2 + $0xf8] sm:$0xff]
    %v104 = vld [vmem:[#allocation3] sm:$0xf]
    %v105 = vld [vmem:[#allocation3 + $0x4] sm:$0xf]
    %v106 = vld [vmem:[#allocation3 + $0x8] sm:$0xf]
    %v107 = vld [vmem:[#allocation3 + $0xc] sm:$0xf]
    %v108 = vld [vmem:[#allocation3 + $0x10] sm:$0xf]
    %v109 = vld [vmem:[#allocation3 + $0x14] sm:$0xf]
    %v110 = vld [vmem:[#allocation3 + $0x18] sm:$0xf]
    %v111 = vld [vmem:[#allocation3 + $0x1c] sm:$0xf]
    %v112 = vld [vmem:[#allocation3 + $0x20] sm:$0xf]
    %v113 = vld [vmem:[#allocation3 + $0x24] sm:$0xf]
    %v114 = vld [vmem:[#allocation3 + $0x28] sm:$0xf]
    %v115 = vld [vmem:[#allocation3 + $0x2c] sm:$0xf]
    %v116 = vld [vmem:[#allocation3 + $0x30] sm:$0xf]
    %v117 = vld [vmem:[#allocation3 + $0x34] sm:$0xf]
    %v118 = vld [vmem:[#allocation3 + $0x38] sm:$0xf]
    %v119 = vld [vmem:[#allocation3 + $0x3c] sm:$0xf]
    %v120 = vld [vmem:[%s1] sm:$0xff]
    %v121 = vld [vmem:[%s1 + $0x8] sm:$0xff]
    %v122 = vld [vmem:[%s1 + $0x10] sm:$0xff]
    %v123 = vld [vmem:[%s1 + $0x18] sm:$0xff]
    %v124 = vld [vmem:[%s1 + $0x20] sm:$0xff]
    %v125 = vld [vmem:[%s1 + $0x28] sm:$0xff]
    %v126 = vld [vmem:[%s1 + $0x30] sm:$0xff]
    %v127 = vld [vmem:[%s1 + $0x38] sm:$0xff]
    %v128 = vld [vmem:[%s1 + $0x40] sm:$0xff]
    %v129 = vld [vmem:[%s1 + $0x48] sm:$0xff]
    %v130 = vld [vmem:[%s1 + $0x50] sm:$0xff]
    %v131 = vld [vmem:[%s1 + $0x58] sm:$0xff]
    %v132 = vld [vmem:[%s1 + $0x60] sm:$0xff]
    %v133 = vld [vmem:[%s1 + $0x68] sm:$0xff]
    %v134 = vld [vmem:[%s1 + $0x70] sm:$0xff]
    %v135 = vld [vmem:[%s1 + $0x78] sm:$0xff]
    %v152 = vunpack.c.l.b16 %v104
    %v153 = vunpack.c.l.b16 %v105
    %v154 = vunpack.c.l.b16 %v106
    %v155 = vunpack.c.l.b16 %v107
    %v156 = vunpack.c.l.b16 %v108
    %v157 = vunpack.c.l.b16 %v109
    %v158 = vunpack.c.l.b16 %v110
    %v159 = vunpack.c.l.b16 %v111
    %v160 = vunpack.c.l.b16 %v112
    %v161 = vunpack.c.l.b16 %v113
    %v162 = vunpack.c.l.b16 %v114
    %v163 = vunpack.c.l.b16 %v115
    %v164 = vunpack.c.l.b16 %v116
    %v165 = vunpack.c.l.b16 %v117
    %v166 = vunpack.c.l.b16 %v118
    %v167 = vunpack.c.l.b16 %v119
    %v168 = vpack.c.b16 %v153, %v152
    %v169 = vpack.c.b16 %v155, %v154
    %v170 = vpack.c.b16 %v157, %v156
    %v171 = vpack.c.b16 %v159, %v158
    %v172 = vpack.c.b16 %v161, %v160
    %v173 = vpack.c.b16 %v163, %v162
    %v174 = vpack.c.b16 %v165, %v164
    %v175 = vpack.c.b16 %v167, %v166
    %v200 = vunpack.c.l.b16 %v120
    %v201 = vunpack.c.h.b16 %v120
    %v202 = vunpack.c.l.b16 %v121
    %v203 = vunpack.c.h.b16 %v121
    %v204 = vunpack.c.l.b16 %v122
    %v205 = vunpack.c.h.b16 %v122
    %v206 = vunpack.c.l.b16 %v123
    %v207 = vunpack.c.h.b16 %v123
    %v208 = vunpack.c.l.b16 %v124
    %v209 = vunpack.c.h.b16 %v124
    %v210 = vunpack.c.l.b16 %v125
    %v211 = vunpack.c.h.b16 %v125
    %v212 = vunpack.c.l.b16 %v126
    %v213 = vunpack.c.h.b16 %v126
    %v214 = vunpack.c.l.b16 %v127
    %v215 = vunpack.c.h.b16 %v127
    %v216 = vunpack.c.l.b16 %v128
    %v217 = vunpack.c.h.b16 %v128
    %v218 = vunpack.c.l.b16 %v129
    %v219 = vunpack.c.h.b16 %v129
    %v220 = vunpack.c.l.b16 %v130
    %v221 = vunpack.c.h.b16 %v130
    %v222 = vunpack.c.l.b16 %v131
    %v223 = vunpack.c.h.b16 %v131
    %v224 = vunpack.c.l.b16 %v132
    %v225 = vunpack.c.h.b16 %v132
    %v226 = vunpack.c.l.b16 %v133
    %v227 = vunpack.c.h.b16 %v133
    %v228 = vunpack.c.l.b16 %v134
    %v229 = vunpack.c.h.b16 %v134
    %v230 = vunpack.c.l.b16 %v135
    %v231 = vunpack.c.h.b16 %v135
    %v232 = vpack.c.b16 %v202, %v200
    %v233 = vpack.c.b16 %v203, %v201
    %v234 = vpack.c.b16 %v206, %v204
    %v235 = vpack.c.b16 %v207, %v205
    %v236 = vpack.c.b16 %v210, %v208
    %v237 = vpack.c.b16 %v211, %v209
    %v238 = vpack.c.b16 %v214, %v212
    %v239 = vpack.c.b16 %v215, %v213
    %v240 = vpack.c.b16 %v218, %v216
    %v241 = vpack.c.b16 %v219, %v217
    %v242 = vpack.c.b16 %v222, %v220
    %v243 = vpack.c.b16 %v223, %v221
    %v244 = vpack.c.b16 %v226, %v224
    %v245 = vpack.c.b16 %v227, %v225
    %v246 = vpack.c.b16 %v230, %v228
    %v247 = vpack.c.b16 %v231, %v229
    %264 = vmatprep.subr.bf16.mxu0 %v233
    %265 = vmatpush1.bf16.msra.mxu0 %v232
    %266 = vmatprep.subr.bf16.mxu0 %v235
    %267 = vmatpush1.bf16.msra.mxu0 %v234
    %268 = vmatprep.subr.bf16.mxu0 %v237
    %269 = vmatpush1.bf16.msra.mxu0 %v236
    %270 = vmatprep.subr.bf16.mxu0 %v239
    %271 = vmatpush1.bf16.msra.mxu0 %v238
    %272 = vmatprep.subr.bf16.mxu0 %v241
    %273 = vmatpush1.bf16.msra.mxu0 %v240
    %274 = vmatprep.subr.bf16.mxu0 %v243
    %275 = vmatpush1.bf16.msra.mxu0 %v242
    %276 = vmatprep.subr.bf16.mxu0 %v245
    %277 = vmatpush1.bf16.msra.mxu0 %v244
    %278 = vmatprep.subr.bf16.mxu0 %v247
    %279 = vmatpush1.bf16.msra.mxu0 %v246
    %280 = vmatprep.subr.bf16.mxu0 0
    %281 = vmatpush1.bf16.msra.mxu0 0
    %282 = vmatprep.subr.bf16.mxu0 0
    %283 = vmatpush1.bf16.msra.mxu0 0
    %284 = vmatprep.subr.bf16.mxu0 0
    %285 = vmatpush1.bf16.msra.mxu0 0
    %286 = vmatprep.subr.bf16.mxu0 0
    %287 = vmatpush1.bf16.msra.mxu0 0
    %288 = vmatprep.subr.bf16.mxu0 0
    %289 = vmatpush1.bf16.msra.mxu0 0
    %290 = vmatprep.subr.bf16.mxu0 0
    %291 = vmatpush1.bf16.msra.mxu0 0
    %292 = vmatprep.subr.bf16.mxu0 0
    %293 = vmatpush1.bf16.msra.mxu0 0
    %294 = vmatprep.subr.bf16.mxu0 0
    %295 = vmatpush1.bf16.msra.mxu0 0
    %296 = vmatprep.mubr.bf16.mxu0 0
    %297 = vmatmul.mubr.bf16.gmra.mrb[0].mxu0 %v168
    %v298 = vpop.f32.mrb[0].mxu0
    %v299 = vadd.f32 0.0, %v298
    %v300 = vpop.f32.mrb[0].mxu0
    %v301 = vadd.f32 0.0, %v300
    %v302 = vpop.f32.mrb[0].mxu0
    %v303 = vadd.f32 0.0, %v302
    %v304 = vpop.f32.mrb[0].mxu0
    %v305 = vadd.f32 0.0, %v304
    %306 = vmatprep.mubr.bf16.mxu0 0
    %307 = vmatmul.mubr.bf16.gmra.mrb[0].mxu0 %v169
    %v308 = vpop.f32.mrb[0].mxu0
    %v309 = vadd.f32 0.0, %v308
    %v310 = vpop.f32.mrb[0].mxu0
    %v311 = vadd.f32 0.0, %v310
    %v312 = vpop.f32.mrb[0].mxu0
    %v313 = vadd.f32 0.0, %v312
    %v314 = vpop.f32.mrb[0].mxu0
    %v315 = vadd.f32 0.0, %v314
    %316 = vmatprep.mubr.bf16.mxu0 0
    %317 = vmatmul.mubr.bf16.gmra.mrb[0].mxu0 %v170
    %v318 = vpop.f32.mrb[0].mxu0
    %v319 = vadd.f32 0.0, %v318
    %v320 = vpop.f32.mrb[0].mxu0
    %v321 = vadd.f32 0.0, %v320
    %v322 = vpop.f32.mrb[0].mxu0
    %v323 = vadd.f32 0.0, %v322
    %v324 = vpop.f32.mrb[0].mxu0
    %v325 = vadd.f32 0.0, %v324
    %326 = vmatprep.mubr.bf16.mxu0 0
    %327 = vmatmul.mubr.bf16.gmra.mrb[0].mxu0 %v171
    %v328 = vpop.f32.mrb[0].mxu0
    %v329 = vadd.f32 0.0, %v328
    %v330 = vpop.f32.mrb[0].mxu0
    %v331 = vadd.f32 0.0, %v330
    %v332 = vpop.f32.mrb[0].mxu0
    %v333 = vadd.f32 0.0, %v332
    %v334 = vpop.f32.mrb[0].mxu0
    %v335 = vadd.f32 0.0, %v334
    %336 = vmatprep.mubr.bf16.mxu0 0
    %337 = vmatmul.mubr.bf16.gmra.mrb[0].mxu0 %v172
    %v338 = vpop.f32.mrb[0].mxu0
    %v339 = vadd.f32 0.0, %v338
    %v340 = vpop.f32.mrb[0].mxu0
    %v341 = vadd.f32 0.0, %v340
    %v342 = vpop.f32.mrb[0].mxu0
    %v343 = vadd.f32 0.0, %v342
    %v344 = vpop.f32.mrb[0].mxu0
    %v345 = vadd.f32 0.0, %v344
    %346 = vmatprep.mubr.bf16.mxu0 0
    %347 = vmatmul.mubr.bf16.gmra.mrb[0].mxu0 %v173
    %v348 = vpop.f32.mrb[0].mxu0
    %v349 = vadd.f32 0.0, %v348
    %v350 = vpop.f32.mrb[0].mxu0
    %v351 = vadd.f32 0.0, %v350
    %v352 = vpop.f32.mrb[0].mxu0
    %v353 = vadd.f32 0.0, %v352
    %v354 = vpop.f32.mrb[0].mxu0
    %v355 = vadd.f32 0.0, %v354
    %356 = vmatprep.mubr.bf16.mxu0 0
    %357 = vmatmul.mubr.bf16.gmra.mrb[0].mxu0 %v174
    %v358 = vpop.f32.mrb[0].mxu0
    %v359 = vadd.f32 0.0, %v358
    %v360 = vpop.f32.mrb[0].mxu0
    %v361 = vadd.f32 0.0, %v360
    %v362 = vpop.f32.mrb[0].mxu0
    %v363 = vadd.f32 0.0, %v362
    %v364 = vpop.f32.mrb[0].mxu0
    %v365 = vadd.f32 0.0, %v364
    %366 = vmatprep.mubr.bf16.mxu0 0
    %367 = vmatmul.mubr.bf16.gmra.mrb[0].mxu0 %v175
    %v368 = vpop.f32.mrb[0].mxu0
    %v369 = vadd.f32 0.0, %v368
    %v370 = vpop.f32.mrb[0].mxu0
    %v371 = vadd.f32 0.0, %v370
    %v372 = vpop.f32.mrb[0].mxu0
    %v373 = vadd.f32 0.0, %v372
    %v374 = vpop.f32.mrb[0].mxu0
    %v375 = vadd.f32 0.0, %v374
    %376 = vdwg.mxu0
    %v377 = vadd.f32 %v72, %v299
    %v378 = vadd.f32 %v73, %v301
    %v379 = vadd.f32 %v74, %v303
    %v380 = vadd.f32 %v75, %v305
    %v381 = vadd.f32 %v76, %v309
    %v382 = vadd.f32 %v77, %v311
    %v383 = vadd.f32 %v78, %v313
    %v384 = vadd.f32 %v79, %v315
    %v385 = vadd.f32 %v80, %v319
    %v386 = vadd.f32 %v81, %v321
    %v387 = vadd.f32 %v82, %v323
    %v388 = vadd.f32 %v83, %v325
    %v389 = vadd.f32 %v84, %v329
    %v390 = vadd.f32 %v85, %v331
    %v391 = vadd.f32 %v86, %v333
    %v392 = vadd.f32 %v87, %v335
    %v393 = vadd.f32 %v88, %v339
    %v394 = vadd.f32 %v89, %v341
    %v395 = vadd.f32 %v90, %v343
    %v396 = vadd.f32 %v91, %v345
    %v397 = vadd.f32 %v92, %v349
    %v398 = vadd.f32 %v93, %v351
    %v399 = vadd.f32 %v94, %v353
    %v400 = vadd.f32 %v95, %v355
    %v401 = vadd.f32 %v96, %v359
    %v402 = vadd.f32 %v97, %v361
    %v403 = vadd.f32 %v98, %v363
    %v404 = vadd.f32 %v99, %v365
    %v405 = vadd.f32 %v100, %v369
    %v406 = vadd.f32 %v101, %v371
    %v407 = vadd.f32 %v102, %v373
    %v408 = vadd.f32 %v103, %v375
    %409 = vst [vmem:[#allocation2] sm:$0xff] %v377
    %410 = vst [vmem:[#allocation2 + $0x8] sm:$0xff] %v378
    %411 = vst [vmem:[#allocation2 + $0x10] sm:$0xff] %v379
    %412 = vst [vmem:[#allocation2 + $0x18] sm:$0xff] %v380
    %413 = vst [vmem:[#allocation2 + $0x20] sm:$0xff] %v381
    %414 = vst [vmem:[#allocation2 + $0x28] sm:$0xff] %v382
    %415 = vst [vmem:[#allocation2 + $0x30] sm:$0xff] %v383
    %416 = vst [vmem:[#allocation2 + $0x38] sm:$0xff] %v384
    %417 = vst [vmem:[#allocation2 + $0x40] sm:$0xff] %v385
    %418 = vst [vmem:[#allocation2 + $0x48] sm:$0xff] %v386
    %419 = vst [vmem:[#allocation2 + $0x50] sm:$0xff] %v387
    %420 = vst [vmem:[#allocation2 + $0x58] sm:$0xff] %v388
    %421 = vst [vmem:[#allocation2 + $0x60] sm:$0xff] %v389
    %422 = vst [vmem:[#allocation2 + $0x68] sm:$0xff] %v390
    %423 = vst [vmem:[#allocation2 + $0x70] sm:$0xff] %v391
    %424 = vst [vmem:[#allocation2 + $0x78] sm:$0xff] %v392
    %425 = vst [vmem:[#allocation2 + $0x80] sm:$0xff] %v393
    %426 = vst [vmem:[#allocation2 + $0x88] sm:$0xff] %v394
    %427 = vst [vmem:[#allocation2 + $0x90] sm:$0xff] %v395
    %428 = vst [vmem:[#allocation2 + $0x98] sm:$0xff] %v396
    %429 = vst [vmem:[#allocation2 + $0xa0] sm:$0xff] %v397
    %430 = vst [vmem:[#allocation2 + $0xa8] sm:$0xff] %v398
    %431 = vst [vmem:[#allocation2 + $0xb0] sm:$0xff] %v399
    %432 = vst [vmem:[#allocation2 + $0xb8] sm:$0xff] %v400
    %433 = vst [vmem:[#allocation2 + $0xc0] sm:$0xff] %v401
    %434 = vst [vmem:[#allocation2 + $0xc8] sm:$0xff] %v402
    %435 = vst [vmem:[#allocation2 + $0xd0] sm:$0xff] %v403
    %436 = vst [vmem:[#allocation2 + $0xd8] sm:$0xff] %v404
    %437 = vst [vmem:[#allocation2 + $0xe0] sm:$0xff] %v405
    %438 = vst [vmem:[#allocation2 + $0xe8] sm:$0xff] %v406
    %439 = vst [vmem:[#allocation2 + $0xf0] sm:$0xff] %v407
    %440 = vst [vmem:[#allocation2 + $0xf8] sm:$0xff] %v408
    // Predicated region
    $region30: #{tpu_custom_call.1} parent=1 // pred_check
      %p441 = pneg %p36
    $region31: #{tpu_custom_call.1} parent=1 // pred_check_branch
      %443 = sbr.rel (%p441) target = $region33
    $region32: #{tpu_custom_call.1} parent=1 // pred_region
      %v444 = vld [vmem:[#allocation2] sm:$0xff]
      %v445 = vld [vmem:[#allocation2 + $0x8] sm:$0xff]
      %v446 = vld [vmem:[#allocation2 + $0x10] sm:$0xff]
      %v447 = vld [vmem:[#allocation2 + $0x18] sm:$0xff]
      %v448 = vld [vmem:[#allocation2 + $0x20] sm:$0xff]
      %v449 = vld [vmem:[#allocation2 + $0x28] sm:$0xff]
      %v450 = vld [vmem:[#allocation2 + $0x30] sm:$0xff]
      %v451 = vld [vmem:[#allocation2 + $0x38] sm:$0xff]
      %v452 = vld [vmem:[#allocation2 + $0x40] sm:$0xff]
      %v453 = vld [vmem:[#allocation2 + $0x48] sm:$0xff]
      %v454 = vld [vmem:[#allocation2 + $0x50] sm:$0xff]
      %v455 = vld [vmem:[#allocation2 + $0x58] sm:$0xff]
      %v456 = vld [vmem:[#allocation2 + $0x60] sm:$0xff]
      %v457 = vld [vmem:[#allocation2 + $0x68] sm:$0xff]
      %v458 = vld [vmem:[#allocation2 + $0x70] sm:$0xff]
      %v459 = vld [vmem:[#allocation2 + $0x78] sm:$0xff]
      %v460 = vld [vmem:[#allocation2 + $0x80] sm:$0xff]
      %v461 = vld [vmem:[#allocation2 + $0x88] sm:$0xff]
      %v462 = vld [vmem:[#allocation2 + $0x90] sm:$0xff]
      %v463 = vld [vmem:[#allocation2 + $0x98] sm:$0xff]
      %v464 = vld [vmem:[#allocation2 + $0xa0] sm:$0xff]
      %v465 = vld [vmem:[#allocation2 + $0xa8] sm:$0xff]
      %v466 = vld [vmem:[#allocation2 + $0xb0] sm:$0xff]
      %v467 = vld [vmem:[#allocation2 + $0xb8] sm:$0xff]
      %v468 = vld [vmem:[#allocation2 + $0xc0] sm:$0xff]
      %v469 = vld [vmem:[#allocation2 + $0xc8] sm:$0xff]
      %v470 = vld [vmem:[#allocation2 + $0xd0] sm:$0xff]
      %v471 = vld [vmem:[#allocation2 + $0xd8] sm:$0xff]
      %v472 = vld [vmem:[#allocation2 + $0xe0] sm:$0xff]
      %v473 = vld [vmem:[#allocation2 + $0xe8] sm:$0xff]
      %v474 = vld [vmem:[#allocation2 + $0xf0] sm:$0xff]
      %v475 = vld [vmem:[#allocation2 + $0xf8] sm:$0xff]
      %v476 = vld [vmem:[%s3] sm:$0xff]
      %v477 = vld [vmem:[%s3 + $0x8] sm:$0xff]
      %v478 = vld [vmem:[%s3 + $0x10] sm:$0xff]
      %v479 = vld [vmem:[%s3 + $0x18] sm:$0xff]
      %v480 = vld [vmem:[%s3 + $0x20] sm:$0xff]
      %v481 = vld [vmem:[%s3 + $0x28] sm:$0xff]
      %v482 = vld [vmem:[%s3 + $0x30] sm:$0xff]
      %v483 = vld [vmem:[%s3 + $0x38] sm:$0xff]
      %v484 = vld [vmem:[%s3 + $0x40] sm:$0xff]
      %v485 = vld [vmem:[%s3 + $0x48] sm:$0xff]
      %v486 = vld [vmem:[%s3 + $0x50] sm:$0xff]
      %v487 = vld [vmem:[%s3 + $0x58] sm:$0xff]
      %v488 = vld [vmem:[%s3 + $0x60] sm:$0xff]
      %v489 = vld [vmem:[%s3 + $0x68] sm:$0xff]
      %v490 = vld [vmem:[%s3 + $0x70] sm:$0xff]
      %v491 = vld [vmem:[%s3 + $0x78] sm:$0xff]
      %493 = vset.pattern.permute.xlu0 0
      %494 = vperm.xlu0 %493, %v476
      %v495 = vpop.permute.xlu0 %494
      %498 = vset.pattern.permute.xlu0 0
      %499 = vperm.xlu0 %498, %v477
      %v500 = vpop.permute.xlu0 %499
      %503 = vset.pattern.permute.xlu0 0
      %504 = vperm.xlu0 %503, %v478
      %v505 = vpop.permute.xlu0 %504
      %508 = vset.pattern.permute.xlu0 0
      %509 = vperm.xlu0 %508, %v479
      %v510 = vpop.permute.xlu0 %509
      %513 = vset.pattern.permute.xlu0 0
      %514 = vperm.xlu0 %513, %v480
      %v515 = vpop.permute.xlu0 %514
      %518 = vset.pattern.permute.xlu0 0
      %519 = vperm.xlu0 %518, %v481
      %v520 = vpop.permute.xlu0 %519
      %523 = vset.pattern.permute.xlu0 0
      %524 = vperm.xlu0 %523, %v482
      %v525 = vpop.permute.xlu0 %524
      %528 = vset.pattern.permute.xlu0 0
      %529 = vperm.xlu0 %528, %v483
      %v530 = vpop.permute.xlu0 %529
      %533 = vset.pattern.permute.xlu0 0
      %534 = vperm.xlu0 %533, %v484
      %v535 = vpop.permute.xlu0 %534
      %538 = vset.pattern.permute.xlu0 0
      %539 = vperm.xlu0 %538, %v485
      %v540 = vpop.permute.xlu0 %539
      %543 = vset.pattern.permute.xlu0 0
      %544 = vperm.xlu0 %543, %v486
      %v545 = vpop.permute.xlu0 %544
      %548 = vset.pattern.permute.xlu0 0
      %549 = vperm.xlu0 %548, %v487
      %v550 = vpop.permute.xlu0 %549
      %553 = vset.pattern.permute.xlu0 0
      %554 = vperm.xlu0 %553, %v488
      %v555 = vpop.permute.xlu0 %554
      %558 = vset.pattern.permute.xlu0 0
      %559 = vperm.xlu0 %558, %v489
      %v560 = vpop.permute.xlu0 %559
      %563 = vset.pattern.permute.xlu0 0
      %564 = vperm.xlu0 %563, %v490
      %v565 = vpop.permute.xlu0 %564
      %568 = vset.pattern.permute.xlu0 0
      %569 = vperm.xlu0 %568, %v491
      %v570 = vpop.permute.xlu0 %569
      %v572 = vmul.f32 %v444, %v495
      %v573 = vmul.f32 %v445, %v495
      %v574 = vmul.f32 %v446, %v500
      %v575 = vmul.f32 %v447, %v500
      %v576 = vmul.f32 %v448, %v505
      %v577 = vmul.f32 %v449, %v505
      %v578 = vmul.f32 %v450, %v510
      %v579 = vmul.f32 %v451, %v510
      %v580 = vmul.f32 %v452, %v515
      %v581 = vmul.f32 %v453, %v515
      %v582 = vmul.f32 %v454, %v520
      %v583 = vmul.f32 %v455, %v520
      %v584 = vmul.f32 %v456, %v525
      %v585 = vmul.f32 %v457, %v525
      %v586 = vmul.f32 %v458, %v530
      %v587 = vmul.f32 %v459, %v530
      %v588 = vmul.f32 %v460, %v535
      %v589 = vmul.f32 %v461, %v535
      %v590 = vmul.f32 %v462, %v540
      %v591 = vmul.f32 %v463, %v540
      %v592 = vmul.f32 %v464, %v545
      %v593 = vmul.f32 %v465, %v545
      %v594 = vmul.f32 %v466, %v550
      %v595 = vmul.f32 %v467, %v550
      %v596 = vmul.f32 %v468, %v555
      %v597 = vmul.f32 %v469, %v555
      %v598 = vmul.f32 %v470, %v560
      %v599 = vmul.f32 %v471, %v560
      %v600 = vmul.f32 %v472, %v565
      %v601 = vmul.f32 %v473, %v565
      %v602 = vmul.f32 %v474, %v570
      %v603 = vmul.f32 %v475, %v570
      %v604 = vld [vmem:[%s4] sm:$0xff]
      %v605 = vld [vmem:[%s4 + $0x8] sm:$0xff]
      %v606 = vld [vmem:[%s4 + $0x10] sm:$0xff]
      %v607 = vld [vmem:[%s4 + $0x18] sm:$0xff]
      %v608 = vld [vmem:[%s4 + $0x20] sm:$0xff]
      %v609 = vld [vmem:[%s4 + $0x28] sm:$0xff]
      %v610 = vld [vmem:[%s4 + $0x30] sm:$0xff]
      %v611 = vld [vmem:[%s4 + $0x38] sm:$0xff]
      %v612 = vld [vmem:[%s4 + $0x40] sm:$0xff]
      %v613 = vld [vmem:[%s4 + $0x48] sm:$0xff]
      %v614 = vld [vmem:[%s4 + $0x50] sm:$0xff]
      %v615 = vld [vmem:[%s4 + $0x58] sm:$0xff]
      %v616 = vld [vmem:[%s4 + $0x60] sm:$0xff]
      %v617 = vld [vmem:[%s4 + $0x68] sm:$0xff]
      %v618 = vld [vmem:[%s4 + $0x70] sm:$0xff]
      %v619 = vld [vmem:[%s4 + $0x78] sm:$0xff]
      %v620 = vld [vmem:[%s2] sm:$0xff]
      %v621 = vld [vmem:[%s2 + $0x8] sm:$0xff]
      %v622 = vld [vmem:[%s2 + $0x10] sm:$0xff]
      %v623 = vld [vmem:[%s2 + $0x18] sm:$0xff]
      %v624 = vld [vmem:[%s2 + $0x20] sm:$0xff]
      %v625 = vld [vmem:[%s2 + $0x28] sm:$0xff]
      %v626 = vld [vmem:[%s2 + $0x30] sm:$0xff]
      %v627 = vld [vmem:[%s2 + $0x38] sm:$0xff]
      %v628 = vld [vmem:[%s2 + $0x40] sm:$0xff]
      %v629 = vld [vmem:[%s2 + $0x48] sm:$0xff]
      %v630 = vld [vmem:[%s2 + $0x50] sm:$0xff]
      %v631 = vld [vmem:[%s2 + $0x58] sm:$0xff]
      %v632 = vld [vmem:[%s2 + $0x60] sm:$0xff]
      %v633 = vld [vmem:[%s2 + $0x68] sm:$0xff]
      %v634 = vld [vmem:[%s2 + $0x70] sm:$0xff]
      %v635 = vld [vmem:[%s2 + $0x78] sm:$0xff]
      %v636 = vunpack.c.l.bf16 %v620
      %v637 = vunpack.c.h.bf16 %v620
      %v638 = vunpack.c.l.bf16 %v621
      %v639 = vunpack.c.h.bf16 %v621
      %v640 = vunpack.c.l.bf16 %v622
      %v641 = vunpack.c.h.bf16 %v622
      %v642 = vunpack.c.l.bf16 %v623
      %v643 = vunpack.c.h.bf16 %v623
      %v644 = vunpack.c.l.bf16 %v624
      %v645 = vunpack.c.h.bf16 %v624
      %v646 = vunpack.c.l.bf16 %v625
      %v647 = vunpack.c.h.bf16 %v625
      %v648 = vunpack.c.l.bf16 %v626
      %v649 = vunpack.c.h.bf16 %v626
      %v650 = vunpack.c.l.bf16 %v627
      %v651 = vunpack.c.h.bf16 %v627
      %v652 = vunpack.c.l.bf16 %v628
      %v653 = vunpack.c.h.bf16 %v628
      %v654 = vunpack.c.l.bf16 %v629
      %v655 = vunpack.c.h.bf16 %v629
      %v656 = vunpack.c.l.bf16 %v630
      %v657 = vunpack.c.h.bf16 %v630
      %v658 = vunpack.c.l.bf16 %v631
      %v659 = vunpack.c.h.bf16 %v631
      %v660 = vunpack.c.l.bf16 %v632
      %v661 = vunpack.c.h.bf16 %v632
      %v662 = vunpack.c.l.bf16 %v633
      %v663 = vunpack.c.h.bf16 %v633
      %v664 = vunpack.c.l.bf16 %v634
      %v665 = vunpack.c.h.bf16 %v634
      %v666 = vunpack.c.l.bf16 %v635
      %v667 = vunpack.c.h.bf16 %v635
      %669 = vset.pattern.permute.xlu0 0
      %670 = vperm.xlu0 %669, %v604
      %v671 = vpop.permute.xlu0 %670
      %674 = vset.pattern.permute.xlu0 0
      %675 = vperm.xlu0 %674, %v605
      %v676 = vpop.permute.xlu0 %675
      %679 = vset.pattern.permute.xlu0 0
      %680 = vperm.xlu0 %679, %v606
      %v681 = vpop.permute.xlu0 %680
      %684 = vset.pattern.permute.xlu0 0
      %685 = vperm.xlu0 %684, %v607
      %v686 = vpop.permute.xlu0 %685
      %689 = vset.pattern.permute.xlu0 0
      %690 = vperm.xlu0 %689, %v608
      %v691 = vpop.permute.xlu0 %690
      %694 = vset.pattern.permute.xlu0 0
      %695 = vperm.xlu0 %694, %v609
      %v696 = vpop.permute.xlu0 %695
      %699 = vset.pattern.permute.xlu0 0
      %700 = vperm.xlu0 %699, %v610
      %v701 = vpop.permute.xlu0 %700
      %704 = vset.pattern.permute.xlu0 0
      %705 = vperm.xlu0 %704, %v611
      %v706 = vpop.permute.xlu0 %705
      %709 = vset.pattern.permute.xlu0 0
      %710 = vperm.xlu0 %709, %v612
      %v711 = vpop.permute.xlu0 %710
      %714 = vset.pattern.permute.xlu0 0
      %715 = vperm.xlu0 %714, %v613
      %v716 = vpop.permute.xlu0 %715
      %719 = vset.pattern.permute.xlu0 0
      %720 = vperm.xlu0 %719, %v614
      %v721 = vpop.permute.xlu0 %720
      %724 = vset.pattern.permute.xlu0 0
      %725 = vperm.xlu0 %724, %v615
      %v726 = vpop.permute.xlu0 %725
      %729 = vset.pattern.permute.xlu0 0
      %730 = vperm.xlu0 %729, %v616
      %v731 = vpop.permute.xlu0 %730
      %734 = vset.pattern.permute.xlu0 0
      %735 = vperm.xlu0 %734, %v617
      %v736 = vpop.permute.xlu0 %735
      %739 = vset.pattern.permute.xlu0 0
      %740 = vperm.xlu0 %739, %v618
      %v741 = vpop.permute.xlu0 %740
      %744 = vset.pattern.permute.xlu0 0
      %745 = vperm.xlu0 %744, %v619
      %v746 = vpop.permute.xlu0 %745
      %v748 = vmul.f32 %v671, %v636
      %v749 = vmul.f32 %v671, %v637
      %v750 = vmul.f32 %v676, %v638
      %v751 = vmul.f32 %v676, %v639
      %v752 = vmul.f32 %v681, %v640
      %v753 = vmul.f32 %v681, %v641
      %v754 = vmul.f32 %v686, %v642
      %v755 = vmul.f32 %v686, %v643
      %v756 = vmul.f32 %v691, %v644
      %v757 = vmul.f32 %v691, %v645
      %v758 = vmul.f32 %v696, %v646
      %v759 = vmul.f32 %v696, %v647
      %v760 = vmul.f32 %v701, %v648
      %v761 = vmul.f32 %v701, %v649
      %v762 = vmul.f32 %v706, %v650
      %v763 = vmul.f32 %v706, %v651
      %v764 = vmul.f32 %v711, %v652
      %v765 = vmul.f32 %v711, %v653
      %v766 = vmul.f32 %v716, %v654
      %v767 = vmul.f32 %v716, %v655
      %v768 = vmul.f32 %v721, %v656
      %v769 = vmul.f32 %v721, %v657
      %v770 = vmul.f32 %v726, %v658
      %v771 = vmul.f32 %v726, %v659
      %v772 = vmul.f32 %v731, %v660
      %v773 = vmul.f32 %v731, %v661
      %v774 = vmul.f32 %v736, %v662
      %v775 = vmul.f32 %v736, %v663
      %v776 = vmul.f32 %v741, %v664
      %v777 = vmul.f32 %v741, %v665
      %v778 = vmul.f32 %v746, %v666
      %v779 = vmul.f32 %v746, %v667
      %v780 = vadd.f32 %v572, %v748
      %v781 = vadd.f32 %v573, %v749
      %v782 = vadd.f32 %v574, %v750
      %v783 = vadd.f32 %v575, %v751
      %v784 = vadd.f32 %v576, %v752
      %v785 = vadd.f32 %v577, %v753
      %v786 = vadd.f32 %v578, %v754
      %v787 = vadd.f32 %v579, %v755
      %v788 = vadd.f32 %v580, %v756
      %v789 = vadd.f32 %v581, %v757
      %v790 = vadd.f32 %v582, %v758
      %v791 = vadd.f32 %v583, %v759
      %v792 = vadd.f32 %v584, %v760
      %v793 = vadd.f32 %v585, %v761
      %v794 = vadd.f32 %v586, %v762
      %v795 = vadd.f32 %v587, %v763
      %v796 = vadd.f32 %v588, %v764
      %v797 = vadd.f32 %v589, %v765
      %v798 = vadd.f32 %v590, %v766
      %v799 = vadd.f32 %v591, %v767
      %v800 = vadd.f32 %v592, %v768
      %v801 = vadd.f32 %v593, %v769
      %v802 = vadd.f32 %v594, %v770
      %v803 = vadd.f32 %v595, %v771
      %v804 = vadd.f32 %v596, %v772
      %v805 = vadd.f32 %v597, %v773
      %v806 = vadd.f32 %v598, %v774
      %v807 = vadd.f32 %v599, %v775
      %v808 = vadd.f32 %v600, %v776
      %v809 = vadd.f32 %v601, %v777
      %v810 = vadd.f32 %v602, %v778
      %v811 = vadd.f32 %v603, %v779
      %v812 = vpack.c.bf16 %v782, %v780
      %v813 = vpack.c.bf16 %v783, %v781
      %v814 = vpack.c.bf16 %v786, %v784
      %v815 = vpack.c.bf16 %v787, %v785
      %v816 = vpack.c.bf16 %v790, %v788
      %v817 = vpack.c.bf16 %v791, %v789
      %v818 = vpack.c.bf16 %v794, %v792
      %v819 = vpack.c.bf16 %v795, %v793
      %v820 = vpack.c.bf16 %v798, %v796
      %v821 = vpack.c.bf16 %v799, %v797
      %v822 = vpack.c.bf16 %v802, %v800
      %v823 = vpack.c.bf16 %v803, %v801
      %v824 = vpack.c.bf16 %v806, %v804
      %v825 = vpack.c.bf16 %v807, %v805
      %v826 = vpack.c.bf16 %v810, %v808
      %v827 = vpack.c.bf16 %v811, %v809
      %v844 = vunpack.c.l.b16 %v812
      %v845 = vunpack.c.l.b16 %v813
      %v846 = vunpack.c.h.b16 %v812
      %v847 = vunpack.c.h.b16 %v813
      %v848 = vunpack.c.l.b16 %v814
      %v849 = vunpack.c.l.b16 %v815
      %v850 = vunpack.c.h.b16 %v814
      %v851 = vunpack.c.h.b16 %v815
      %v852 = vunpack.c.l.b16 %v816
      %v853 = vunpack.c.l.b16 %v817
      %v854 = vunpack.c.h.b16 %v816
      %v855 = vunpack.c.h.b16 %v817
      %v856 = vunpack.c.l.b16 %v818
      %v857 = vunpack.c.l.b16 %v819
      %v858 = vunpack.c.h.b16 %v818
      %v859 = vunpack.c.h.b16 %v819
      %v860 = vunpack.c.l.b16 %v820
      %v861 = vunpack.c.l.b16 %v821
      %v862 = vunpack.c.h.b16 %v820
      %v863 = vunpack.c.h.b16 %v821
      %v864 = vunpack.c.l.b16 %v822
      %v865 = vunpack.c.l.b16 %v823
      %v866 = vunpack.c.h.b16 %v822
      %v867 = vunpack.c.h.b16 %v823
      %v868 = vunpack.c.l.b16 %v824
      %v869 = vunpack.c.l.b16 %v825
      %v870 = vunpack.c.h.b16 %v824
      %v871 = vunpack.c.h.b16 %v825
      %v872 = vunpack.c.l.b16 %v826
      %v873 = vunpack.c.l.b16 %v827
      %v874 = vunpack.c.h.b16 %v826
      %v875 = vunpack.c.h.b16 %v827
      %v876 = vpack.c.b16 %v845, %v844
      %v877 = vpack.c.b16 %v847, %v846
      %v878 = vpack.c.b16 %v849, %v848
      %v879 = vpack.c.b16 %v851, %v850
      %v880 = vpack.c.b16 %v853, %v852
      %v881 = vpack.c.b16 %v855, %v854
      %v882 = vpack.c.b16 %v857, %v856
      %v883 = vpack.c.b16 %v859, %v858
      %v884 = vpack.c.b16 %v861, %v860
      %v885 = vpack.c.b16 %v863, %v862
      %v886 = vpack.c.b16 %v865, %v864
      %v887 = vpack.c.b16 %v867, %v866
      %v888 = vpack.c.b16 %v869, %v868
      %v889 = vpack.c.b16 %v871, %v870
      %v890 = vpack.c.b16 %v873, %v872
      %v891 = vpack.c.b16 %v875, %v874
      %908 = vst [vmem:[#allocation6] sm:$0xff] %v876
      %909 = vst [vmem:[#allocation6 + $0x8] sm:$0xff] %v877
      %910 = vst [vmem:[#allocation6 + $0x10] sm:$0xff] %v878
      %911 = vst [vmem:[#allocation6 + $0x18] sm:$0xff] %v879
      %912 = vst [vmem:[#allocation6 + $0x20] sm:$0xff] %v880
      %913 = vst [vmem:[#allocation6 + $0x28] sm:$0xff] %v881
      %914 = vst [vmem:[#allocation6 + $0x30] sm:$0xff] %v882
      %915 = vst [vmem:[#allocation6 + $0x38] sm:$0xff] %v883
      %916 = vst [vmem:[#allocation6 + $0x40] sm:$0xff] %v884
      %917 = vst [vmem:[#allocation6 + $0x48] sm:$0xff] %v885
      %918 = vst [vmem:[#allocation6 + $0x50] sm:$0xff] %v886
      %919 = vst [vmem:[#allocation6 + $0x58] sm:$0xff] %v887
      %920 = vst [vmem:[#allocation6 + $0x60] sm:$0xff] %v888
      %921 = vst [vmem:[#allocation6 + $0x68] sm:$0xff] %v889
      %922 = vst [vmem:[#allocation6 + $0x70] sm:$0xff] %v890
      %923 = vst [vmem:[#allocation6 + $0x78] sm:$0xff] %v891
    $region33: #{tpu_custom_call.1} parent=1 // pred_fallthru
      _
    // Predicated region
    $region34: #{tpu_custom_call.1} parent=1 // pred_check
      _
    $region35: #{tpu_custom_call.1} parent=1 // pred_check_branch
      %925 = sbr.rel (0) target = $region37
    $region36: #{tpu_custom_call.1} parent=1 // pred_region
      %s927 = ssub.s32 2048, 2048
      %928 = vsyncadd [#allocation5], %s927
      %s929 = sshll.u32 [#allocation6], 4
      %s930 = int_to_ptr.vmem [resolvable:$true] %s929
      %935 = dma.vmem_to_hbm [thread:$0]  %s930, 2048, %s5, [#allocation5], 128, 128, 8
    $region37: #{tpu_custom_call.1} parent=1 // pred_fallthru
      _
    // Predicated region
    $region38: #{tpu_custom_call.1} parent=1 // pred_check
      _
    $region39: #{tpu_custom_call.1} parent=1 // pred_check_branch
      %937 = sbr.rel (0) target = $region41
    $region40: #{tpu_custom_call.1} parent=1 // pred_region
      %938 = dma.done [#allocation5], 2048
    $region41: #{tpu_custom_call.1} parent=1 // pred_fallthru
      _
    %939 = vsyncpa [#allocation4], 1
    %940 = vsyncpa [#allocation5], 1

</llo_original>
